<compile_context>
chip_gen: v7x
topology: tpu7x:2x2x1
jax: 0.10.0
libtpu: 0.0.40
codegen_flags: <defaults>
</compile_context>

<pallas_src>
import collections
import functools

import jax
import jax.numpy as jnp
from jax.experimental import pallas as pl
from jax.experimental.pallas import tpu as pltpu


_TilePlan = collections.namedtuple(
    "_TilePlan", ["tile_rows", "num_cores", "num_inner", "vmem_limit"])


def _round_up(x, m):
    return ((x + m - 1) // m) * m


def _vmem_limit_bytes():
    """Scoped-VMEM request derived from the physical per-core capacity.

    Clamped to <= 64 MiB: on v7x `get_tpu_info` may report the per-chip
    capacity (128 MiB for 2 TensorCores) while only 64 MiB exist per core.
    """
    cap = 0
    try:
        info = pltpu.get_tpu_info()
        cap = int(getattr(info, "vmem_capacity_bytes", 0) or 0)
    except Exception:
        cap = 0
    if cap <= 0:
        cap = 64 * 1024 * 1024
    cap = min(cap, 128 * 1024 * 1024)
    return min((cap * 3) // 4, 64 * 1024 * 1024)


def _plan_tiles(rows, lanes, in_itemsize):
    """Pick tile_rows / core split / vmem limit for the streaming kernel."""
    l128 = _round_up(lanes, 128)          # VMEM lane footprint of one row
    vmem_limit = _vmem_limit_bytes()
    # 2 streaming inputs x 2 pipeline buffers, ~10 tile-sized f32/int32
    # temporaries in the body, plus the (tr,1) istd / output blocks which each
    # occupy full (8,128)-granular f32 tiles in VMEM.
    budget = min(vmem_limit // 2, 32 * 1024 * 1024)   # 32 MiB v5e/v6e, 24 MiB v7x
    per_row = l128 * (2 * 2 * in_itemsize + 10 * 4) + 3 * 128 * 4
    tr = int(budget // max(per_row, 1))
    tr = max(8, min(tr, 1024, _round_up(rows, 8)))
    tr -= tr % 8
    blocks = -(-rows // tr)               # cdiv
    # 2-way core split only when it divides the block count evenly, so every
    # grid step maps to a real (possibly ragged-at-the-end) block.
    if blocks >= 2 and blocks % 2 == 0:
        num_cores, num_inner = 2, blocks // 2   # v7x: 2 TensorCores per chip
    else:
        num_cores, num_inner = 1, blocks
    return _TilePlan(tr, num_cores, num_inner, vmem_limit)


# ---------------------------------------------------------------------------
# Stateless dropout keep-mask: murmur3-style integer hash of
# (seed, global element index).  Plain int32 jnp ops only.
# ---------------------------------------------------------------------------
def _keep_mask(idx, seed, keep_prob):
    """idx: int32 array of global element ids; seed: int32 scalar."""
    x = idx * (-1640531527) + seed                  # 0x9e3779b9 (golden ratio)
    # murmur3 fmix32; logical right shifts emulated as (arith >>) & mask so
    # everything stays in int32 (bit-identical to the uint32 version).
    x = x ^ ((x >> 16) & 0xFFFF)
    x = x * (-2048144789)                           # 0x85ebca6b
    x = x ^ ((x >> 13) & 0x7FFFF)
    x = x * (-1028477387)                           # 0xc2b2ae35
    x = x ^ ((x >> 16) & 0xFFFF)
    thresh = min(int(keep_prob * 2147483648.0), 2147483647)
    # keep decision in the integer domain (no int->float convert, no fp cmp).
    return (x & 0x7FFFFFFF) < thresh


def _keep_mask_full(rows, lanes, seed, keep_prob):
    """Pure-JAX reproduction of the in-kernel dropout keep mask."""
    r = jnp.arange(rows, dtype=jnp.int32)[:, None]
    l = jnp.arange(lanes, dtype=jnp.int32)[None, :]
    return _keep_mask(r * lanes + l, seed, keep_prob)


# ---------------------------------------------------------------------------
# Kernel
# ---------------------------------------------------------------------------
def _cwd_kernel(seed_ref, t_ref, s_ref, istd_ref, out_ref, *,
                tau, keep_prob, rows_total, lanes, tile_rows, num_inner):
    c = pl.program_id(0)     # core-split index ("parallel")
    j = pl.program_id(1)     # row-block index within this core ("arbitrary")
    row0 = (c * num_inner + j) * tile_rows

    @pl.when(j == 0)
    def _init():
        out_ref[...] = jnp.zeros_like(out_ref)

    inv_tau = 1.0 / tau

    # ---- teacher: fused stateless dropout + temperature ---------------------
    t = t_ref[...].astype(jnp.float32)
    if keep_prob < 1.0:
        rows_i = jax.lax.broadcasted_iota(jnp.int32, t.shape, 0) + row0
        lane_i = jax.lax.broadcasted_iota(jnp.int32, t.shape, 1)
        keep = _keep_mask(rows_i * lanes + lane_i, seed_ref[0], keep_prob)
        t = jnp.where(keep, t * (inv_tau / keep_prob), 0.0)
    else:
        t = t * inv_tau

    # ---- student: fused BatchNorm scale (the per-row shift cancels inside
    #      log-softmax) + temperature ------------------------------------------
    s = s_ref[...].astype(jnp.float32) * (istd_ref[...].astype(jnp.float32) * inv_tau)

    # ---- per-row softmax(T) * (logsoftmax(T) - logsoftmax(S)) ---------------
    t_max = jnp.max(t, axis=1, keepdims=True)
    t_shift = t - t_max
    t_exp = jnp.exp(t_shift)
    t_sum = jnp.sum(t_exp, axis=1, keepdims=True)

    s_max = jnp.max(s, axis=1, keepdims=True)
    s_shift = s - s_max
    s_sum = jnp.sum(jnp.exp(s_shift), axis=1, keepdims=True)

    # Per-row log-ratio constant hoisted out of the per-element math
    # (valid because sum(t_exp) == t_sum exactly).
    contrib = t_exp * (t_shift - s_shift)
    row_kl = (jnp.sum(contrib, axis=1, keepdims=True) / t_sum
              + (jnp.log(s_sum) - jnp.log(t_sum)))

    if rows_total % tile_rows != 0:
        # Ragged trailing row-block: rows past the real extent hold unspecified
        # VMEM data and may produce NaN row_kl — mask them before accumulating.
        rid = jax.lax.broadcasted_iota(jnp.int32, row_kl.shape, 0) + row0
        row_kl = jnp.where(rid < rows_total, row_kl, 0.0)

    out_ref[...] += row_kl


def _cwd_sum_pallas(t_rows, s_rows, inv_std_rows, seed_arr, *, tau, keep_prob):
    """Sum over all rows of softmax_T * (logsoftmax_T - logsoftmax_S)."""
    R, L = t_rows.shape
    plan = _plan_tiles(R, L, jnp.dtype(t_rows.dtype).itemsize)
    tr, ncores, ninner = plan.tile_rows, plan.num_cores, plan.num_inner

    kernel = functools.partial(
        _cwd_kernel, tau=float(tau), keep_prob=float(keep_prob),
        rows_total=R, lanes=L, tile_rows=tr, num_inner=ninner)

    out = pl.pallas_call(
        kernel,
        out_shape=jax.ShapeDtypeStruct((ncores * tr, 1), jnp.float32),
        grid_spec=pltpu.PrefetchScalarGridSpec(
            num_scalar_prefetch=1,
            grid=(ncores, ninner),
            in_specs=[
                # Full H*W as the lane block dim -> no host-side padding/copies.
                pl.BlockSpec((tr, L), lambda c, j, seed: (c * ninner + j, 0)),
                pl.BlockSpec((tr, L), lambda c, j, seed: (c * ninner + j, 0)),
                pl.BlockSpec((tr, 1), lambda c, j, seed: (c * ninner + j, 0)),
            ],
            out_specs=pl.BlockSpec((tr, 1), lambda c, j, seed: (c, 0)),
        ),
        compiler_params=pltpu.CompilerParams(
            dimension_semantics=("parallel", "arbitrary"),
            vmem_limit_bytes=plan.vmem_limit),
    )(seed_arr, t_rows, s_rows, inv_std_rows)
    return jnp.sum(out)


# ---------------------------------------------------------------------------
# Public wrapper (forward pass of AKD_ChannelWiseDivergence)
# ---------------------------------------------------------------------------
def _stage_seed(key):
    # int32 seed (scalar-prefetch operand) for the in-kernel hash dropout.
    return jax.random.randint(key, (1,), 0, 2 ** 30, dtype=jnp.int32)


def _stage_loss(s, t, seed_arr, *, tau, drop_rate):
    N, C, H, W = s.shape
    R, L = N * C, H * W
    # BatchNorm2d(affine=False, training mode) -> per-channel batch statistics.
    # log-softmax is invariant to the per-row (-mean*inv_std) shift, so only
    # the per-channel 1/sqrt(var+eps) scale reaches the kernel.  Single fused
    # pass over s (var = E[x^2] - E[x]^2 with f32 accumulation; XLA fuses the
    # two sibling reductions into one read of s) instead of two-pass jnp.var.
    n = N * H * W
    s_sum = jnp.sum(s, axis=(0, 2, 3), dtype=jnp.float32)
    s_sqs = jnp.sum(jnp.square(s.astype(jnp.float32)), axis=(0, 2, 3))
    mean = s_sum / n
    var = jnp.maximum(s_sqs / n - mean * mean, 0.0)
    inv_std = jax.lax.rsqrt(var + 1e-5)                     # (C,)
    inv_std_rows = jnp.tile(inv_std, N).reshape(R, 1)       # row n*C + c
    cost = _cwd_sum_pallas(t.reshape(R, L), s.reshape(R, L), inv_std_rows,
                           seed_arr, tau=tau, keep_prob=1.0 - drop_rate)
    return cost * (tau ** 2) / (C * N)


def akd_channelwise_divergence(y_s, y_t, key, *, tau=1.0, loss_weight=1.0,
                               drop_rate=0.1):
    """Forward pass of AKD_ChannelWiseDivergence.

    y_s, y_t: (N, C, H, W) arrays (or lists of them) — student / teacher,
              f32 or bf16 (bf16 is read as-is and upcast in-kernel; the
              wrapper never inserts a standalone dtype cast).
    key:      PRNG key; teacher dropout is always active (training=True).
    """
    if not isinstance(y_s, (tuple, list)):
        y_s = (y_s,)
        y_t = (y_t,)
    assert len(y_s) == len(y_t)
    assert 0.0 <= drop_rate < 1.0

    # `t = self.Uncertain(t)` in the torch forward is dead code for the loss
    # (its result never reaches the cost) and is omitted.
    # TODO(synk): BatchNorm2d(2048) running-statistics buffer updates
    # (training-time side effect only) are not tracked; they do not affect the
    # returned loss value.
    losses = []
    for s, t in zip(y_s, y_t):
        assert s.shape == t.shape
        key, dkey = jax.random.split(key)
        losses.append(_stage_loss(s, t, _stage_seed(dkey),
                                  tau=tau, drop_rate=drop_rate))
    return sum(losses) * loss_weight


# ---------------------------------------------------------------------------
# Pure-JAX reference (uses the exact in-kernel dropout mask)
# ---------------------------------------------------------------------------
def _reference_loss(y_s, y_t, keep_mask, *, tau=1.0, loss_weight=1.0,
                    drop_rate=0.1):
    y_s = y_s.astype(jnp.float32)
    y_t = y_t.astype(jnp.float32)
    N, C, H, W = y_s.shape
    keep_prob = 1.0 - drop_rate
    t_rows = y_t.reshape(N * C, H * W)
    multi_t = jnp.where(keep_mask, t_rows / keep_prob, 0.0)
    mean = jnp.mean(y_s, axis=(0, 2, 3), keepdims=True)
    var = jnp.var(y_s, axis=(0, 2, 3), keepdims=True)
    s_bn = ((y_s - mean) / jnp.sqrt(var + 1e-5)).reshape(N * C, H * W)
    tl = multi_t / tau
    sl = s_bn / tau
    sm_t = jax.nn.softmax(tl, axis=1)
    cost = jnp.sum(sm_t * (jax.nn.log_softmax(tl, axis=1)
                           - jax.nn.log_softmax(sl, axis=1))) * tau ** 2
    return cost / (C * N) * loss_weight


if __name__ == "__main__":
    key = jax.random.PRNGKey(0)
    k_s, k_t, k_drop = jax.random.split(key, 3)

    N, C, H, W = 2, 4, 16, 16
    y_s = jax.random.normal(k_s, (N, C, H, W), dtype=jnp.float32)
    y_t = jax.random.normal(k_t, (N, C, H, W), dtype=jnp.float32)
    tau, loss_weight, drop_rate = 1.0, 1.0, 0.1

    loss = akd_channelwise_divergence(y_s, y_t, k_drop, tau=tau,
                                      loss_weight=loss_weight,
                                      drop_rate=drop_rate)
    loss = jax.block_until_ready(loss)

    # Reproduce the exact in-kernel dropout mask (same key split / seed
    # derivation as the wrapper) for the pure-JAX reference.
    _, dkey = jax.random.split(k_drop)
    seed_arr = _stage_seed(dkey)
    keep = _keep_mask_full(N * C, H * W, seed_arr[0], 1.0 - drop_rate)

    ref = _reference_loss(y_s, y_t, keep, tau=tau, loss_weight=loss_weight,
                          drop_rate=drop_rate)
    assert jnp.allclose(loss, ref, rtol=1e-3, atol=1e-4), (loss, ref)

    # bf16 inputs (as produced directly by a bf16 backbone): same f32 in-kernel
    # math, half the HBM read bytes; no wrapper-side cast is inserted.
    y_s16, y_t16 = y_s.astype(jnp.bfloat16), y_t.astype(jnp.bfloat16)
    loss16 = akd_channelwise_divergence(y_s16, y_t16, k_drop, tau=tau,
                                        loss_weight=loss_weight,
                                        drop_rate=drop_rate)
    loss16 = jax.block_until_ready(loss16)
    ref16 = _reference_loss(y_s16, y_t16, keep, tau=tau,
                            loss_weight=loss_weight, drop_rate=drop_rate)
    assert jnp.allclose(loss16, ref16, rtol=2e-2, atol=1e-2), (loss16, ref16)

    print("KERNEL_OK")
</pallas_src>

<mosaic_0001>
module attributes {stable_mosaic.version = 11 : i64} {
  func.func @_cwd_kernel(%arg0: i32, %arg1: i32, %arg2: memref<1xi32, #tpu.memory_space<smem>>, %arg3: memref<8x256xf32, #tpu.memory_space<vmem>>, %arg4: memref<8x256xf32, #tpu.memory_space<vmem>>, %arg5: memref<8x1xf32, #tpu.memory_space<vmem>>, %arg6: memref<8x1xf32, #tpu.memory_space<vmem>>) attributes {dimension_semantics = [#tpu.dimension_semantics<parallel>, #tpu.dimension_semantics<arbitrary>], iteration_bounds = array<i64: 1, 1>, scalar_prefetch = 1 : i64, scratch_operands = 0 : i64, tpu.core_type = #tpu.core_type<tc>, window_params = [{transform_indices = @transform_0, window_bounds = array<i64: 8, 256>}, {transform_indices = @transform_1, window_bounds = array<i64: 8, 256>}, {transform_indices = @transform_2, window_bounds = array<i64: 8, 1>}, {transform_indices = @transform_3, window_bounds = array<i64: 8, 1>}]} {
    %c1_i32 = arith.constant 1 : i32
    %0 = arith.muli %arg0, %c1_i32 : i32
    %1 = arith.addi %0, %arg1 : i32
    %c8_i32 = arith.constant 8 : i32
    %2 = arith.muli %1, %c8_i32 : i32
    %c0_i32 = arith.constant 0 : i32
    %3 = arith.cmpi eq, %arg1, %c0_i32 : i32
    %4 = arith.extui %3 : i1 to i32
    %c0_i32_0 = arith.constant 0 : i32
    %5 = arith.cmpi ne, %4, %c0_i32_0 : i32
    scf.if %5 {
      %cst_20 = arith.constant 0.000000e+00 : f32
      %78 = vector.broadcast %cst_20 : f32 to vector<8x1xf32>
      %c0_21 = arith.constant 0 : index
      %c0_22 = arith.constant 0 : index
      %79 = vector.load %arg6[%c0_21, %c0_22] : memref<8x1xf32, #tpu.memory_space<vmem>>, vector<8x1xf32>
      tpu.vector_store %arg6[%c0_21, %c0_22], %78 {strides = array<i32>} : memref<8x1xf32, #tpu.memory_space<vmem>>, vector<8x1xf32>,
    } else {
    }
    %c0 = arith.constant 0 : index
    %c0_1 = arith.constant 0 : index
    %6 = vector.load %arg3[%c0, %c0_1] : memref<8x256xf32, #tpu.memory_space<vmem>>, vector<8x256xf32>
    %7 = tpu.iota {dimensions = array<i32: 0>} : vector<8x256xi32>
    %8 = vector.broadcast %2 : i32 to vector<8x256xi32>
    %9 = arith.addi %7, %8 : vector<8x256xi32>
    %10 = tpu.iota {dimensions = array<i32: 1>} : vector<8x256xi32>
    %c256_i32 = arith.constant 256 : i32
    %11 = vector.broadcast %c256_i32 : i32 to vector<8x256xi32>
    %12 = arith.muli %9, %11 : vector<8x256xi32>
    %13 = arith.addi %12, %10 : vector<8x256xi32>
    %c0_2 = arith.constant 0 : index
    %14 = memref.load %arg2[%c0_2] : memref<1xi32, #tpu.memory_space<smem>>
    %c-1640531527_i32 = arith.constant -1640531527 : i32
    %15 = vector.broadcast %c-1640531527_i32 : i32 to vector<8x256xi32>
    %16 = arith.muli %13, %15 : vector<8x256xi32>
    %17 = vector.broadcast %14 : i32 to vector<8x256xi32>
    %18 = arith.addi %16, %17 : vector<8x256xi32>
    %c16_i32 = arith.constant 16 : i32
    %19 = vector.broadcast %c16_i32 : i32 to vector<8x256xi32>
    %20 = arith.shrsi %18, %19 : vector<8x256xi32>
    %c65535_i32 = arith.constant 65535 : i32
    %21 = vector.broadcast %c65535_i32 : i32 to vector<8x256xi32>
    %22 = arith.andi %20, %21 : vector<8x256xi32>
    %23 = arith.xori %18, %22 : vector<8x256xi32>
    %c-2048144789_i32 = arith.constant -2048144789 : i32
    %24 = vector.broadcast %c-2048144789_i32 : i32 to vector<8x256xi32>
    %25 = arith.muli %23, %24 : vector<8x256xi32>
    %c13_i32 = arith.constant 13 : i32
    %26 = vector.broadcast %c13_i32 : i32 to vector<8x256xi32>
    %27 = arith.shrsi %25, %26 : vector<8x256xi32>
    %c524287_i32 = arith.constant 524287 : i32
    %28 = vector.broadcast %c524287_i32 : i32 to vector<8x256xi32>
    %29 = arith.andi %27, %28 : vector<8x256xi32>
    %30 = arith.xori %25, %29 : vector<8x256xi32>
    %c-1028477387_i32 = arith.constant -1028477387 : i32
    %31 = vector.broadcast %c-1028477387_i32 : i32 to vector<8x256xi32>
    %32 = arith.muli %30, %31 : vector<8x256xi32>
    %c16_i32_3 = arith.constant 16 : i32
    %33 = vector.broadcast %c16_i32_3 : i32 to vector<8x256xi32>
    %34 = arith.shrsi %32, %33 : vector<8x256xi32>
    %c65535_i32_4 = arith.constant 65535 : i32
    %35 = vector.broadcast %c65535_i32_4 : i32 to vector<8x256xi32>
    %36 = arith.andi %34, %35 : vector<8x256xi32>
    %37 = arith.xori %32, %36 : vector<8x256xi32>
    %c2147483647_i32 = arith.constant 2147483647 : i32
    %38 = vector.broadcast %c2147483647_i32 : i32 to vector<8x256xi32>
    %39 = arith.andi %37, %38 : vector<8x256xi32>
    %c1932735283_i32 = arith.constant 1932735283 : i32
    %40 = vector.broadcast %c1932735283_i32 : i32 to vector<8x256xi32>
    %41 = arith.cmpi slt, %39, %40 : vector<8x256xi32>
    %cst = arith.constant 1.11111116 : f32
    %42 = vector.broadcast %cst : f32 to vector<8x256xf32>
    %43 = arith.mulf %6, %42 : vector<8x256xf32>
    %cst_5 = arith.constant 0.000000e+00 : f32
    %44 = vector.broadcast %cst_5 : f32 to vector<8x256xf32>
    %45 = arith.select %41, %43, %44 : vector<8x256xi1>, vector<8x256xf32>
    %c0_6 = arith.constant 0 : index
    %c0_7 = arith.constant 0 : index
    %46 = vector.load %arg4[%c0_6, %c0_7] : memref<8x256xf32, #tpu.memory_space<vmem>>, vector<8x256xf32>
    %c0_8 = arith.constant 0 : index
    %c0_9 = arith.constant 0 : index
    %47 = vector.load %arg5[%c0_8, %c0_9] : memref<8x1xf32, #tpu.memory_space<vmem>>, vector<8x1xf32>
    %cst_10 = arith.constant 1.000000e+00 : f32
    %48 = vector.broadcast %cst_10 : f32 to vector<8x1xf32>
    %49 = arith.mulf %47, %48 : vector<8x1xf32>
    %50 = vector.broadcast %49 : vector<8x1xf32> to vector<8x256xf32>
    %51 = arith.mulf %46, %50 : vector<8x256xf32>
    %cst_11 = arith.constant dense<0xFF800000> : vector<8xf32>
    %52 = vector.multi_reduction <maximumf>, %45, %cst_11 [1] : vector<8x256xf32> to vector<8xf32>
    %53 = vector.shape_cast %52 : vector<8xf32> to vector<8x1xf32>
    %54 = vector.broadcast %53 : vector<8x1xf32> to vector<8x256xf32>
    %55 = arith.subf %45, %54 : vector<8x256xf32>
    %56 = math.exp %55 : vector<8x256xf32>
    %cst_12 = arith.constant dense<0.000000e+00> : vector<8xf32>
    %57 = vector.multi_reduction <add>, %56, %cst_12 [1] : vector<8x256xf32> to vector<8xf32>
    %58 = vector.shape_cast %57 : vector<8xf32> to vector<8x1xf32>
    %cst_13 = arith.constant dense<0xFF800000> : vector<8xf32>
    %59 = vector.multi_reduction <maximumf>, %51, %cst_13 [1] : vector<8x256xf32> to vector<8xf32>
    %60 = vector.shape_cast %59 : vector<8xf32> to vector<8x1xf32>
    %61 = vector.broadcast %60 : vector<8x1xf32> to vector<8x256xf32>
    %62 = arith.subf %51, %61 : vector<8x256xf32>
    %63 = math.exp %62 : vector<8x256xf32>
    %cst_14 = arith.constant dense<0.000000e+00> : vector<8xf32>
    %64 = vector.multi_reduction <add>, %63, %cst_14 [1] : vector<8x256xf32> to vector<8xf32>
    %65 = vector.shape_cast %64 : vector<8xf32> to vector<8x1xf32>
    %66 = arith.subf %55, %62 : vector<8x256xf32>
    %67 = arith.mulf %56, %66 : vector<8x256xf32>
    %cst_15 = arith.constant dense<0.000000e+00> : vector<8xf32>
    %68 = vector.multi_reduction <add>, %67, %cst_15 [1] : vector<8x256xf32> to vector<8xf32>
    %69 = vector.shape_cast %68 : vector<8xf32> to vector<8x1xf32>
    %70 = arith.divf %69, %58 : vector<8x1xf32>
    %71 = math.log %65 : vector<8x1xf32>
    %72 = math.log %58 : vector<8x1xf32>
    %73 = arith.subf %71, %72 : vector<8x1xf32>
    %74 = arith.addf %70, %73 : vector<8x1xf32>
    %c0_16 = arith.constant 0 : index
    %c0_17 = arith.constant 0 : index
    %75 = vector.load %arg6[%c0_16, %c0_17] : memref<8x1xf32, #tpu.memory_space<vmem>>, vector<8x1xf32>
    %76 = arith.addf %75, %74 : vector<8x1xf32>
    %c0_18 = arith.constant 0 : index
    %c0_19 = arith.constant 0 : index
    %77 = vector.load %arg6[%c0_18, %c0_19] : memref<8x1xf32, #tpu.memory_space<vmem>>, vector<8x1xf32>
    tpu.vector_store %arg6[%c0_18, %c0_19], %76 {strides = array<i32>} : memref<8x1xf32, #tpu.memory_space<vmem>>, vector<8x1xf32>,
    return
  }
  func.func @transform_0(%arg0: i32, %arg1: i32, %arg2: memref<1xi32, #tpu.memory_space<smem>>) -> (i32, i32) {
    %c1_i32 = arith.constant 1 : i32
    %0 = arith.muli %arg0, %c1_i32 : i32
    %1 = arith.addi %0, %arg1 : i32
    %c0_i32 = arith.constant 0 : i32
    %c0_i32_0 = arith.constant 0 : i32
    return %1, %c0_i32 : i32, i32
  }
  func.func @transform_1(%arg0: i32, %arg1: i32, %arg2: memref<1xi32, #tpu.memory_space<smem>>) -> (i32, i32) {
    %c1_i32 = arith.constant 1 : i32
    %0 = arith.muli %arg0, %c1_i32 : i32
    %1 = arith.addi %0, %arg1 : i32
    %c0_i32 = arith.constant 0 : i32
    %c0_i32_0 = arith.constant 0 : i32
    return %1, %c0_i32 : i32, i32
  }
  func.func @transform_2(%arg0: i32, %arg1: i32, %arg2: memref<1xi32, #tpu.memory_space<smem>>) -> (i32, i32) {
    %c1_i32 = arith.constant 1 : i32
    %0 = arith.muli %arg0, %c1_i32 : i32
    %1 = arith.addi %0, %arg1 : i32
    %c0_i32 = arith.constant 0 : i32
    %c0_i32_0 = arith.constant 0 : i32
    return %1, %c0_i32 : i32, i32
  }
  func.func @transform_3(%arg0: i32, %arg1: i32, %arg2: memref<1xi32, #tpu.memory_space<smem>>) -> (i32, i32) {
    %c0_i32 = arith.constant 0 : i32
    %c0_i32_0 = arith.constant 0 : i32
    return %arg0, %c0_i32 : i32, i32
  }
}

</mosaic_0001>

<llo_original>
// kernel: tpu_custom_call.1
$region0: #{tpu_custom_call.1}
  #allocation0 [shape = 'u32[]', space=smem, size = 0x4, offset = 0x4, fixed_abs, tag = 'smem constant byte address 0x4 - core index']
  #allocation1 [shape = 'u32[144,128]{1,0:T(1,128)}', space=vmem, size = 0x12000, scoped, tag = 'internal scratch']
  #allocation2 [shape = 's32[1]{0}', space=sflag, size = 0x4, scoped, tag = 'scoped memory for tpu_custom_call.1']
  #allocation3 [shape = 's32[1]{0:T(128)S(6)}', space=smem, size = 0x200, scoped, tag = 'prefetched SMEM operand 0']
  %s0 = inlined_call_operand.<no memory space> [shape: s32[1], index: 0, kind: input, shape index: {}]
  %s1 = inlined_call_operand.hbm [shape: f32[8,256], index: 1, kind: input, shape index: {}]
  %s2 = inlined_call_operand.vmem [shape: f32[8,256], index: 2, kind: input, shape index: {}]
  %s3 = inlined_call_operand.vmem [shape: f32[8,1], index: 3, kind: input, shape index: {}]
  %s4 = inlined_call_operand.vmem [shape: f32[8,1], index: 4, kind: output, shape index: {}]
  %s5 = sld [smem:[#allocation0]]
  $region30: #{tpu_custom_call.1} parent=0
    _
  %s7 = ssub.s32 1, %s5
  %s8 = scalar_select 0, %s7, %s5
  %9 = sst [smem:[#allocation3]] %s0
  $region1: #{tpu_custom_call.1} parent=0
    #allocation4 [shape = 'u8[8192]{0}', space=vmem, size = 0x2000, scoped, tag = 'input window, operand 1, single buffered']
    #allocation5 [shape = 's32[1]{0}', space=sflag, size = 0x4, scoped, tag = 'scoped memory for tpu_custom_call.1']
    %10 = vsyncpa [#allocation5], 0
    // Predicated region
    $region2: #{tpu_custom_call.1} parent=1 // pred_check
      _
    $region3: #{tpu_custom_call.1} parent=1 // pred_check_branch
      %12 = sbr.rel (0) target = $region5
    $region4: #{tpu_custom_call.1} parent=1 // pred_region
      %s13 = sadd.s32 0, 0
      %s15 = ssub.s32 256, 256
      %16 = vsyncadd [#allocation5], %s15
      %s17 = smul.addr %s13, 2
      %s18 = smul.addr %s17, 128
      %s19 = scalar_lea.hbm %s1, %s18
      %s21 = sshll.u32 [#allocation4], 4
      %s22 = int_to_ptr.vmem [resolvable:$true] %s21
      %24 = dma.hbm_to_vmem [thread:$0]  %s19, 256, %s22, [#allocation5]
    $region5: #{tpu_custom_call.1} parent=1 // pred_fallthru
      _
    // Predicated region
    $region6: #{tpu_custom_call.1} parent=1 // pred_check
      _
    $region7: #{tpu_custom_call.1} parent=1 // pred_check_branch
      %26 = sbr.rel (0) target = $region9
    $region8: #{tpu_custom_call.1} parent=1 // pred_region
      %s27 = sadd.s32 0, 0
      %p28 = scmp.lt.s32.totalorder %s27, 0
      %s29 = scalar_select %p28, %s27, 0
      %s30 = smul.addr %s29, 2
      %s31 = smul.addr %s30, 8
      %s32 = scalar_lea.vmem %s2, %s31
      %s33 = sadd.s32 0, 0
    $region9: #{tpu_custom_call.1} parent=1 // pred_fallthru
      _
    // Predicated region
    $region10: #{tpu_custom_call.1} parent=1 // pred_check
      _
    $region11: #{tpu_custom_call.1} parent=1 // pred_check_branch
      %35 = sbr.rel (0) target = $region13
    $region12: #{tpu_custom_call.1} parent=1 // pred_region
      %s36 = sadd.s32 0, 0
      %p37 = scmp.lt.s32.totalorder %s36, 0
      %s38 = scalar_select %p37, %s36, 0
      %s39 = smul.addr %s38, 8
      %s40 = scalar_lea.vmem %s3, %s39
      %s41 = sadd.s32 0, 0
    $region13: #{tpu_custom_call.1} parent=1 // pred_fallthru
      _
    // Predicated region
    $region14: #{tpu_custom_call.1} parent=1 // pred_check
      _
    $region15: #{tpu_custom_call.1} parent=1 // pred_check_branch
      %43 = sbr.rel (0) target = $region17
    $region16: #{tpu_custom_call.1} parent=1 // pred_region
      %44 = dma.done [#allocation5], 256
    $region17: #{tpu_custom_call.1} parent=1 // pred_fallthru
      _
    %s45 = sadd.s32 0, 0
    %p46 = scmp.lt.s32.totalorder %s45, 0
    %s47 = scalar_select %p46, %s45, 0
    %s48 = smul.addr %s47, 2
    %s49 = smul.addr %s48, 8
    %s50 = scalar_lea.vmem %s2, %s49
    %s51 = sadd.s32 0, 0
    %p52 = scmp.lt.s32.totalorder %s51, 0
    %s53 = scalar_select %p52, %s51, 0
    %s54 = smul.addr %s53, 8
    %s55 = scalar_lea.vmem %s3, %s54
    %s56 = sadd.s32 0, 0
    %s57 = sadd.s32 0, 0
    %p58 = scmp.lt.s32.totalorder %s57, 0
    %s59 = scalar_select %p58, %s57, 0
    %s60 = smul.addr %s59, 2
    %s61 = smul.addr %s60, 8
    %s62 = scalar_lea.vmem %s2, %s61
    %s63 = sadd.s32 0, 0
    %s64 = sadd.s32 0, 0
    %p65 = scmp.lt.s32.totalorder %s64, 0
    %s66 = scalar_select %p65, %s64, 0
    %s67 = smul.addr %s66, 8
    %s68 = scalar_lea.vmem %s3, %s67
    %s69 = sadd.s32 0, 0
    %s70 = sadd.s32 0, 0
    %s71 = smul.u32 %s70, 8
    %p72 = scmp.eq.s32.totalorder 0, 0
    // Predicated region
    $region18: #{tpu_custom_call.1} parent=1 // pred_check
      %p73 = pneg %p72
    $region19: #{tpu_custom_call.1} parent=1 // pred_check_branch
      %75 = sbr.rel (%p73) target = $region21
    $region20: #{tpu_custom_call.1} parent=1 // pred_region
      %vm76 = vcmask 7168
      %77 = vst.msk [vmem:[%s4] sm:$0xff] %vm76, 0.0
    $region21: #{tpu_custom_call.1} parent=1 // pred_fallthru
      _
    %v78 = vld [vmem:[#allocation4] sm:$0xff]
    %v79 = vld [vmem:[#allocation4 + $0x8] sm:$0xff]
    %v80 = vlaneseq
    %v81 = vshrl.u32 %v80, 7
    %v82 = vstv %s71
    %v83 = vadd.s32 %v81, %v82
    %v84 = vlaneseq
    %v85 = vand.u32 %v84, 127
    %v86 = vadd.s32 %v85, 128
    %v87 = vmul.u32 %v83, 256
    %v88 = vadd.s32 %v87, %v85
    %v89 = vadd.s32 %v87, %v86
    %s90 = sld [smem:[#allocation3]]
    %v91 = vmul.u32 %v88, 2654435769
    %v92 = vmul.u32 %v89, 2654435769
    %v93 = vstv %s90
    %v94 = vadd.s32 %v91, %v93
    %v95 = vadd.s32 %v92, %v93
    %v96 = vshra.s32 %v94, 16
    %v97 = vshra.s32 %v95, 16
    %v98 = vand.u32 %v96, 65535
    %v99 = vand.u32 %v97, 65535
    %v100 = vxor.u32 %v94, %v98
    %v101 = vxor.u32 %v95, %v99
    %v102 = vmul.u32 %v100, 2246822507
    %v103 = vmul.u32 %v101, 2246822507
    %v104 = vshra.s32 %v102, 13
    %v105 = vshra.s32 %v103, 13
    %v106 = vand.u32 %v104, 524287
    %v107 = vand.u32 %v105, 524287
    %v108 = vxor.u32 %v102, %v106
    %v109 = vxor.u32 %v103, %v107
    %v110 = vmul.u32 %v108, 3266489909
    %v111 = vmul.u32 %v109, 3266489909
    %v112 = vshra.s32 %v110, 16
    %v113 = vshra.s32 %v111, 16
    %v114 = vand.u32 %v112, 65535
    %v115 = vand.u32 %v113, 65535
    %v116 = vxor.u32 %v110, %v114
    %v117 = vxor.u32 %v111, %v115
    %v118 = vand.u32 %v116, 2147483647
    %v119 = vand.u32 %v117, 2147483647
    %vm120 = vcmp.lt.s32.totalorder %v118, 1932735283
    %vm121 = vcmp.lt.s32.totalorder %v119, 1932735283
    %v122 = vmul.f32 %v78, 1.1111112
    %v123 = vmul.f32 %v79, 1.1111112
    %v124 = vsel %vm120, %v122, 0.0
    %v125 = vsel %vm121, %v123, 0.0
    %v126 = vld [vmem:[%s62] sm:$0xff]
    %v127 = vld [vmem:[%s62 + $0x8] sm:$0xff]
    %v128 = vld [vmem:[%s68] sm:$0xff]
    %130 = vset.pattern.permute.xlu0 0
    %131 = vperm.xlu0 %130, %v128
    %v132 = vpop.permute.xlu0 %131
    %v134 = vmul.f32 %v126, %v132
    %v135 = vmul.f32 %v127, %v132
    %v136 = vmax.f32 %v124, %v125
    %137 = vmax.xlane.f32.xlu0 %v136
    %v138 = vpop.xlane.xlu0 %137
    %v139 = vsub.f32 %v124, %v138
    %v140 = vsub.f32 %v125, %v138
    %v141 = vmul.f32 %v139, 1.442695
    %v142 = vpow.pop %v141
    %v143 = vmul.f32 %v140, 1.442695
    %v144 = vpow.pop %v143
    %v145 = vadd.f32 %v142, %v144
    %146 = vadd.xlane.f32.xlu0 %v145
    %v147 = vpop.xlane.xlu0 %146
    %v148 = vmax.f32 %v134, %v135
    %149 = vmax.xlane.f32.xlu0 %v148
    %v150 = vpop.xlane.xlu0 %149
    %v151 = vsub.f32 %v134, %v150
    %v152 = vsub.f32 %v135, %v150
    %v153 = vmul.f32 %v151, 1.442695
    %v154 = vpow.pop %v153
    %v155 = vmul.f32 %v152, 1.442695
    %v156 = vpow.pop %v155
    %v157 = vadd.f32 %v154, %v156
    %158 = vadd.xlane.f32.xlu0 %v157
    %v159 = vpop.xlane.xlu0 %158
    %v160 = vsub.f32 %v139, %v151
    %v161 = vsub.f32 %v140, %v152
    %v162 = vmul.f32 %v142, %v160
    %v163 = vmul.f32 %v144, %v161
    %v164 = vadd.f32 %v162, %v163
    %165 = vadd.xlane.f32.xlu0 %v164
    %v166 = vpop.xlane.xlu0 %165
    %v167 = vrcp.pop %v147
    %v168 = vmul.f32 %v166, %v167
    %v169 = vlog2.pop %v159
    %v170 = vmul.f32 %v169, 0.6931472
    %v171 = vlog2.pop %v147
    %v172 = vmul.f32 %v171, 0.6931472
    %v173 = vsub.f32 %v170, %v172
    %v174 = vadd.f32 %v168, %v173
    %v175 = vld [vmem:[%s4] sm:$0xff]
    %v176 = vadd.f32 %v175, %v174
    %vm177 = vcmask 7168
    %178 = vst.msk [vmem:[%s4] sm:$0xff] %vm177, %v176
    // Predicated region
    $region22: #{tpu_custom_call.1} parent=1 // pred_check
      _
    $region23: #{tpu_custom_call.1} parent=1 // pred_check_branch
      %180 = sbr.rel (0) target = $region25
    $region24: #{tpu_custom_call.1} parent=1 // pred_region
      _
    $region25: #{tpu_custom_call.1} parent=1 // pred_fallthru
      _
    // Predicated region
    $region26: #{tpu_custom_call.1} parent=1 // pred_check
      _
    $region27: #{tpu_custom_call.1} parent=1 // pred_check_branch
      %182 = sbr.rel (0) target = $region29
    $region28: #{tpu_custom_call.1} parent=1 // pred_region
      _
    $region29: #{tpu_custom_call.1} parent=1 // pred_fallthru
      _
    %183 = vsyncpa [#allocation5], 1

</llo_original>
